<compile_context>
chip_gen: v6e
topology: v6e:2x2x1
jax: 0.10.0
libtpu: 0.0.40
codegen_flags: <defaults>
</compile_context>

<pallas_src>
import functools
import math

import jax
import jax.numpy as jnp
from jax.experimental import pallas as pl
from jax.experimental.pallas import tpu as pltpu

NEG_SLOPE = 0.2


def _leaky_relu(x):
    return jnp.where(x > 0, x, NEG_SLOPE * x)


def downblock_kernel(xe_ref, xo_ref, w1_ref, b1_ref, wa_ref, ba_ref,
                     wb_ref, bb_ref, o_ref, *, c_out, l1, bt, compute_dtype):
    """One grid step = Bt batch elements; lane col = position*bt + batch."""
    n = l1 * bt

    # ---- conv1: Conv1d(nf, c_out, kernel=4, stride=2, pad=1) ----
    xe = xe_ref[...]                 # (C_in, (l1+1)*bt): padded positions 0,2,4,...
    xo = xo_ref[...]                 # (C_in, (l1+1)*bt): padded positions 1,3,5,...
    im1 = jnp.concatenate(           # (4*C_in, n); row = tap*C_in + c_in
        [xe[:, 0:n],                 # tap 0 -> x_pad[2j]
         xo[:, 0:n],                 # tap 1 -> x_pad[2j+1]
         xe[:, bt:bt + n],           # tap 2 -> x_pad[2j+2]
         xo[:, bt:bt + n]],          # tap 3 -> x_pad[2j+3]
        axis=0)
    h = jnp.dot(w1_ref[...], im1,
                preferred_element_type=jnp.float32) + b1_ref[...]
    h = _leaky_relu(h)               # (c_out, n), f32
    identity = h

    # ---- ResidualDenseBlock: two Conv1d(c_out, c_out, k=3, s=1, p=1) ----
    # TODO(synk): the block's nn.Dropout is defined but never used in forward; omitted.
    zblk = jnp.zeros((c_out, bt), jnp.float32)

    def conv3(x, w_ref, b_ref):
        # 3 accumulating matmuls against Bt-lane shifted views of a single
        # zero-padded buffer (avoids materializing a (3*c_out, n) im2col).
        xp = jnp.concatenate([zblk, x, zblk], axis=1).astype(compute_dtype)
        acc = jnp.dot(w_ref[0], xp[:, 0:n], preferred_element_type=jnp.float32)
        acc = acc + jnp.dot(w_ref[1], xp[:, bt:bt + n],
                            preferred_element_type=jnp.float32)
        acc = acc + jnp.dot(w_ref[2], xp[:, 2 * bt:2 * bt + n],
                            preferred_element_type=jnp.float32)
        return acc + b_ref[...]

    g = conv3(h, wa_ref, ba_ref)
    g = conv3(g, wb_ref, bb_ref)
    g = _leaky_relu(g)
    r = identity + g                 # (c_out, n), f32

    # ---- MaxPool1d(k=3, s=2, p=1): stride-1 window max (lane dense) ----
    # Stride-2 decimation happens in the wrapper (pooled output p == window
    # max centred at stride-1 position 2p).
    ninf = jnp.full((c_out, bt), -jnp.inf, jnp.float32)
    rp = jnp.concatenate([ninf, r, ninf], axis=1)
    o_ref[...] = jnp.maximum(jnp.maximum(rp[:, 0:n], rp[:, bt:bt + n]),
                             rp[:, 2 * bt:2 * bt + n])


def _pick_batch_tile(B, l1, target_lanes=512, max_lanes=4096):
    """Largest divisor of B with bt*l1 <= max_lanes, preferring >= target_lanes."""
    best = 1
    for d in range(1, B + 1):
        if B % d == 0 and d * l1 <= max_lanes:
            best = d
            if d * l1 >= target_lanes:
                break
    return best


def downblock_forward(x, params, *, bt=None, use_bf16=False):
    """x: (B, nf, L) float32. Returns (B, output_nc, L//4)."""
    B, C_in, L = x.shape
    assert L % 2 == 0, "even/odd lane split assumes an even sequence length"
    w1, b1 = params["w1"], params["b1"]
    wa, ba = params["wa"], params["ba"]
    wb, bb = params["wb"], params["bb"]
    C_out = w1.shape[0]

    L1 = (L + 2 * 1 - 4) // 2 + 1          # conv1 output length (= L // 2)
    Lp = (L1 + 2 * 1 - 3) // 2 + 1         # maxpool output length

    if bt is None:
        bt = _pick_batch_tile(B, L1)
    assert B % bt == 0, (B, bt)
    nblk = B // bt

    cdt = jnp.bfloat16 if use_bf16 else jnp.float32   # MXU operand dtype

    # Glue: zero-pad (conv1 padding=1), split into even/odd positions, and
    # fold each Bt-sized batch block into the lane axis:
    # column = position*bt + batch_in_block.
    x_pad = jnp.pad(x, ((0, 0), (0, 0), (1, 1)))
    xe = x_pad[:, :, 0::2]                 # (B, C_in, L1 + 1)
    xo = x_pad[:, :, 1::2]                 # (B, C_in, L1 + 1)

    def to_blocks(a):
        M = a.shape[-1]
        a = a.reshape(nblk, bt, C_in, M).transpose(0, 2, 3, 1)
        return a.reshape(nblk, C_in, M * bt).astype(cdt)

    xe_r = to_blocks(xe)                   # (nblk, C_in, (L1+1)*bt)
    xo_r = to_blocks(xo)

    # Glue: conv weights in matmul layout.
    #   conv1 -> (C_out, 4*C_in), row = tap*C_in + c_in  (K=4*nf -> full MXU K)
    #   k=3 convs -> (3, C_out, C_out): one (C_out, C_out) block per tap
    w1_mat = jnp.transpose(w1, (0, 2, 1)).reshape(C_out, 4 * C_in).astype(cdt)
    wa_t = jnp.transpose(wa, (2, 0, 1)).astype(cdt)
    wb_t = jnp.transpose(wb, (2, 0, 1)).astype(cdt)
    b1c = b1.reshape(C_out, 1).astype(jnp.float32)
    bac = ba.reshape(C_out, 1).astype(jnp.float32)
    bbc = bb.reshape(C_out, 1).astype(jnp.float32)

    kernel = functools.partial(downblock_kernel, c_out=C_out, l1=L1, bt=bt,
                               compute_dtype=cdt)

    batch_in = pl.BlockSpec((None, C_in, (L1 + 1) * bt), lambda i: (i, 0, 0))
    const2d = lambda shape: pl.BlockSpec(shape, lambda i: (0, 0))
    const3d = lambda shape: pl.BlockSpec(shape, lambda i: (0, 0, 0))
    # NOTE: the constant weight/bias blocks could also use
    # pipeline_mode=pl.Buffered(1); they are only a few KiB at these shapes.
    # TODO(synk): for very large L add an L1-tiling grid axis (1-2 col halo).

    m = pl.pallas_call(
        kernel,
        out_shape=jax.ShapeDtypeStruct((nblk, C_out, L1 * bt), jnp.float32),
        grid=(nblk,),
        in_specs=[
            batch_in,                         # xe (even padded positions)
            batch_in,                         # xo (odd padded positions)
            const2d((C_out, 4 * C_in)),       # w1_mat
            const2d((C_out, 1)),              # b1
            const3d((3, C_out, C_out)),       # wa taps
            const2d((C_out, 1)),              # ba
            const3d((3, C_out, C_out)),       # wb taps
            const2d((C_out, 1)),              # bb
        ],
        out_specs=pl.BlockSpec((None, C_out, L1 * bt), lambda i: (i, 0, 0)),
        compiler_params=pltpu.CompilerParams(
            dimension_semantics=("parallel",)),   # shard batch blocks on v7x TCs
    )(xe_r, xo_r, w1_mat, b1c, wa_t, bac, wb_t, bbc)

    # Glue: un-fold (position, batch) lanes and apply the pool's stride-2
    # decimation as a strided slice (O(L), VMEM-flat).
    m = m.reshape(nblk, C_out, L1, bt).transpose(0, 3, 1, 2).reshape(B, C_out, L1)
    return m[:, :, ::2][:, :, :Lp]


def ref_forward(x, w1, b1, wa, ba, wb, bb):
    """Pure-JAX reference matching the PyTorch DownBlock forward."""
    dn = ("NCH", "OIH", "NCH")
    h = jax.lax.conv_general_dilated(x, w1, (2,), [(1, 1)],
                                     dimension_numbers=dn) + b1[None, :, None]
    h = jnp.where(h > 0, h, NEG_SLOPE * h)
    g = jax.lax.conv_general_dilated(h, wa, (1,), [(1, 1)],
                                     dimension_numbers=dn) + ba[None, :, None]
    g = jax.lax.conv_general_dilated(g, wb, (1,), [(1, 1)],
                                     dimension_numbers=dn) + bb[None, :, None]
    g = jnp.where(g > 0, g, NEG_SLOPE * g)
    r = h + g
    return jax.lax.reduce_window(r, -jnp.inf, jax.lax.max,
                                 (1, 1, 3), (1, 1, 2),
                                 ((0, 0), (0, 0), (1, 1)))


if __name__ == "__main__":
    B, nf, output_nc, L = 4, 64, 2, 32

    key = jax.random.PRNGKey(0)
    ks = jax.random.split(key, 7)

    def kaiming(k, shape, fan_in, scale=0.1):
        return jax.random.normal(k, shape, jnp.float32) * (math.sqrt(2.0 / fan_in) * scale)

    # Deterministic synthetic parameters (kaiming-like weights; small nonzero
    # biases so the bias path is exercised).
    params = dict(
        w1=kaiming(ks[0], (output_nc, nf, 4), nf * 4),
        b1=0.01 * jax.random.normal(ks[1], (output_nc,), jnp.float32),
        wa=kaiming(ks[2], (output_nc, output_nc, 3), output_nc * 3),
        ba=0.01 * jax.random.normal(ks[3], (output_nc,), jnp.float32),
        wb=kaiming(ks[4], (output_nc, output_nc, 3), output_nc * 3),
        bb=0.01 * jax.random.normal(ks[5], (output_nc,), jnp.float32),
    )
    x = jax.random.normal(ks[6], (B, nf, L), jnp.float32)

    ref = ref_forward(x, **params)

    # f32, auto batch tile (all batch items folded into one lane-dense step)
    out = jax.block_until_ready(downblock_forward(x, params))
    assert out.shape == (B, output_nc, L // 4), out.shape
    assert bool(jnp.allclose(out, ref, atol=1e-4, rtol=1e-4)), "f32 mismatch vs reference"

    # f32, forced bt=2 -> exercises the multi-step (parallel) grid path
    out2 = jax.block_until_ready(downblock_forward(x, params, bt=2))
    assert bool(jnp.allclose(out2, ref, atol=1e-4, rtol=1e-4)), "tiled mismatch vs reference"

    # bf16 MXU operands (v6e/v7x native), f32 accumulation and elementwise
    out_bf = jax.block_until_ready(downblock_forward(x, params, use_bf16=True))
    assert bool(jnp.allclose(out_bf, ref, atol=5e-2, rtol=5e-2)), "bf16 mismatch vs reference"

    print("KERNEL_OK")
</pallas_src>

<mosaic_0001>
module attributes {stable_mosaic.version = 11 : i64} {
  func.func @downblock_kernel(%arg0: i32, %arg1: memref<1x64x68xf32, #tpu.memory_space<vmem>>, %arg2: memref<1x64x68xf32, #tpu.memory_space<vmem>>, %arg3: memref<2x256xf32, #tpu.memory_space<vmem>>, %arg4: memref<2x1xf32, #tpu.memory_space<vmem>>, %arg5: memref<3x2x2xf32, #tpu.memory_space<vmem>>, %arg6: memref<2x1xf32, #tpu.memory_space<vmem>>, %arg7: memref<3x2x2xf32, #tpu.memory_space<vmem>>, %arg8: memref<2x1xf32, #tpu.memory_space<vmem>>, %arg9: memref<1x2x64xf32, #tpu.memory_space<vmem>>) attributes {dimension_semantics = [#tpu.dimension_semantics<parallel>], iteration_bounds = array<i64: 1>, scalar_prefetch = 0 : i64, scratch_operands = 0 : i64, tpu.core_type = #tpu.core_type<tc>, window_params = [{transform_indices = @transform_0, window_bounds = array<i64: 1, 64, 68>}, {transform_indices = @transform_1, window_bounds = array<i64: 1, 64, 68>}, {pipeline_mode = #tpu.pipeline_mode<synchronous>, transform_indices = @transform_2, window_bounds = array<i64: 2, 256>}, {pipeline_mode = #tpu.pipeline_mode<synchronous>, transform_indices = @transform_3, window_bounds = array<i64: 2, 1>}, {pipeline_mode = #tpu.pipeline_mode<synchronous>, transform_indices = @transform_4, window_bounds = array<i64: 3, 2, 2>}, {pipeline_mode = #tpu.pipeline_mode<synchronous>, transform_indices = @transform_5, window_bounds = array<i64: 2, 1>}, {pipeline_mode = #tpu.pipeline_mode<synchronous>, transform_indices = @transform_6, window_bounds = array<i64: 3, 2, 2>}, {pipeline_mode = #tpu.pipeline_mode<synchronous>, transform_indices = @transform_7, window_bounds = array<i64: 2, 1>}, {transform_indices = @transform_8, window_bounds = array<i64: 1, 2, 64>}]} {
    %c0 = arith.constant 0 : index
    %c0_0 = arith.constant 0 : index
    %c0_1 = arith.constant 0 : index
    %0 = vector.load %arg1[%c0, %c0_0, %c0_1] : memref<1x64x68xf32, #tpu.memory_space<vmem>>, vector<1x64x68xf32>
    %1 = vector.shape_cast %0 : vector<1x64x68xf32> to vector<64x68xf32>
    %c0_2 = arith.constant 0 : index
    %c0_3 = arith.constant 0 : index
    %c0_4 = arith.constant 0 : index
    %2 = vector.load %arg2[%c0_2, %c0_3, %c0_4] : memref<1x64x68xf32, #tpu.memory_space<vmem>>, vector<1x64x68xf32>
    %3 = vector.shape_cast %2 : vector<1x64x68xf32> to vector<64x68xf32>
    %4 = vector.extract_strided_slice %1 {offsets = [0, 0], sizes = [64, 64], strides = [1, 1]} : vector<64x68xf32> to vector<64x64xf32>
    %5 = vector.extract_strided_slice %3 {offsets = [0, 0], sizes = [64, 64], strides = [1, 1]} : vector<64x68xf32> to vector<64x64xf32>
    %6 = vector.extract_strided_slice %1 {offsets = [0, 4], sizes = [64, 64], strides = [1, 1]} : vector<64x68xf32> to vector<64x64xf32>
    %7 = vector.extract_strided_slice %3 {offsets = [0, 4], sizes = [64, 64], strides = [1, 1]} : vector<64x68xf32> to vector<64x64xf32>
    %8 = tpu.concatenate %4, %5, %6, %7 in 0 : vector<64x64xf32>, vector<64x64xf32>, vector<64x64xf32>, vector<64x64xf32> -> vector<256x64xf32>
    %c0_5 = arith.constant 0 : index
    %c0_6 = arith.constant 0 : index
    %9 = vector.load %arg3[%c0_5, %c0_6] : memref<2x256xf32, #tpu.memory_space<vmem>>, vector<2x256xf32>
    %cst = arith.constant dense<0.000000e+00> : vector<2x64xf32>
    %10 = tpu.matmul %9, %8, %cst {dimension_numbers = #tpu.dot_dimension_numbers<[1], [0], [0], [1], [0, 0, 1, 1], [], []>} : vector<2x256xf32>, vector<256x64xf32>, vector<2x64xf32> -> vector<2x64xf32>
    %c0_7 = arith.constant 0 : index
    %c0_8 = arith.constant 0 : index
    %11 = vector.load %arg4[%c0_7, %c0_8] : memref<2x1xf32, #tpu.memory_space<vmem>>, vector<2x1xf32>
    %12 = vector.broadcast %11 : vector<2x1xf32> to vector<2x64xf32>
    %13 = arith.addf %10, %12 : vector<2x64xf32>
    %cst_9 = arith.constant 0.000000e+00 : f32
    %14 = vector.broadcast %cst_9 : f32 to vector<2x64xf32>
    %15 = arith.cmpf ogt, %13, %14 : vector<2x64xf32>
    %cst_10 = arith.constant 2.000000e-01 : f32
    %16 = vector.broadcast %cst_10 : f32 to vector<2x64xf32>
    %17 = arith.mulf %16, %13 : vector<2x64xf32>
    %18 = arith.select %15, %13, %17 : vector<2x64xi1>, vector<2x64xf32>
    %cst_11 = arith.constant 0.000000e+00 : f32
    %19 = vector.broadcast %cst_11 : f32 to vector<2x4xf32>
    %20 = tpu.concatenate %19, %18, %19 in 1 : vector<2x4xf32>, vector<2x64xf32>, vector<2x4xf32> -> vector<2x72xf32>
    %c0_12 = arith.constant 0 : index
    %c0_13 = arith.constant 0 : index
    %c0_14 = arith.constant 0 : index
    %21 = vector.load %arg5[%c0_12, %c0_13, %c0_14] : memref<3x2x2xf32, #tpu.memory_space<vmem>>, vector<1x2x2xf32>
    %22 = vector.shape_cast %21 : vector<1x2x2xf32> to vector<2x2xf32>
    %23 = vector.extract_strided_slice %20 {offsets = [0, 0], sizes = [2, 64], strides = [1, 1]} : vector<2x72xf32> to vector<2x64xf32>
    %cst_15 = arith.constant dense<0.000000e+00> : vector<2x64xf32>
    %24 = tpu.matmul %22, %23, %cst_15 {dimension_numbers = #tpu.dot_dimension_numbers<[1], [0], [0], [1], [0, 0, 1, 1], [], []>} : vector<2x2xf32>, vector<2x64xf32>, vector<2x64xf32> -> vector<2x64xf32>
    %c1 = arith.constant 1 : index
    %c0_16 = arith.constant 0 : index
    %c0_17 = arith.constant 0 : index
    %25 = vector.load %arg5[%c1, %c0_16, %c0_17] : memref<3x2x2xf32, #tpu.memory_space<vmem>>, vector<1x2x2xf32>
    %26 = vector.shape_cast %25 : vector<1x2x2xf32> to vector<2x2xf32>
    %27 = vector.extract_strided_slice %20 {offsets = [0, 4], sizes = [2, 64], strides = [1, 1]} : vector<2x72xf32> to vector<2x64xf32>
    %cst_18 = arith.constant dense<0.000000e+00> : vector<2x64xf32>
    %28 = tpu.matmul %26, %27, %cst_18 {dimension_numbers = #tpu.dot_dimension_numbers<[1], [0], [0], [1], [0, 0, 1, 1], [], []>} : vector<2x2xf32>, vector<2x64xf32>, vector<2x64xf32> -> vector<2x64xf32>
    %29 = arith.addf %24, %28 : vector<2x64xf32>
    %c2 = arith.constant 2 : index
    %c0_19 = arith.constant 0 : index
    %c0_20 = arith.constant 0 : index
    %30 = vector.load %arg5[%c2, %c0_19, %c0_20] : memref<3x2x2xf32, #tpu.memory_space<vmem>>, vector<1x2x2xf32>
    %31 = vector.shape_cast %30 : vector<1x2x2xf32> to vector<2x2xf32>
    %32 = vector.extract_strided_slice %20 {offsets = [0, 8], sizes = [2, 64], strides = [1, 1]} : vector<2x72xf32> to vector<2x64xf32>
    %cst_21 = arith.constant dense<0.000000e+00> : vector<2x64xf32>
    %33 = tpu.matmul %31, %32, %cst_21 {dimension_numbers = #tpu.dot_dimension_numbers<[1], [0], [0], [1], [0, 0, 1, 1], [], []>} : vector<2x2xf32>, vector<2x64xf32>, vector<2x64xf32> -> vector<2x64xf32>
    %34 = arith.addf %29, %33 : vector<2x64xf32>
    %c0_22 = arith.constant 0 : index
    %c0_23 = arith.constant 0 : index
    %35 = vector.load %arg6[%c0_22, %c0_23] : memref<2x1xf32, #tpu.memory_space<vmem>>, vector<2x1xf32>
    %36 = vector.broadcast %35 : vector<2x1xf32> to vector<2x64xf32>
    %37 = arith.addf %34, %36 : vector<2x64xf32>
    %38 = tpu.concatenate %19, %37, %19 in 1 : vector<2x4xf32>, vector<2x64xf32>, vector<2x4xf32> -> vector<2x72xf32>
    %c0_24 = arith.constant 0 : index
    %c0_25 = arith.constant 0 : index
    %c0_26 = arith.constant 0 : index
    %39 = vector.load %arg7[%c0_24, %c0_25, %c0_26] : memref<3x2x2xf32, #tpu.memory_space<vmem>>, vector<1x2x2xf32>
    %40 = vector.shape_cast %39 : vector<1x2x2xf32> to vector<2x2xf32>
    %41 = vector.extract_strided_slice %38 {offsets = [0, 0], sizes = [2, 64], strides = [1, 1]} : vector<2x72xf32> to vector<2x64xf32>
    %cst_27 = arith.constant dense<0.000000e+00> : vector<2x64xf32>
    %42 = tpu.matmul %40, %41, %cst_27 {dimension_numbers = #tpu.dot_dimension_numbers<[1], [0], [0], [1], [0, 0, 1, 1], [], []>} : vector<2x2xf32>, vector<2x64xf32>, vector<2x64xf32> -> vector<2x64xf32>
    %c1_28 = arith.constant 1 : index
    %c0_29 = arith.constant 0 : index
    %c0_30 = arith.constant 0 : index
    %43 = vector.load %arg7[%c1_28, %c0_29, %c0_30] : memref<3x2x2xf32, #tpu.memory_space<vmem>>, vector<1x2x2xf32>
    %44 = vector.shape_cast %43 : vector<1x2x2xf32> to vector<2x2xf32>
    %45 = vector.extract_strided_slice %38 {offsets = [0, 4], sizes = [2, 64], strides = [1, 1]} : vector<2x72xf32> to vector<2x64xf32>
    %cst_31 = arith.constant dense<0.000000e+00> : vector<2x64xf32>
    %46 = tpu.matmul %44, %45, %cst_31 {dimension_numbers = #tpu.dot_dimension_numbers<[1], [0], [0], [1], [0, 0, 1, 1], [], []>} : vector<2x2xf32>, vector<2x64xf32>, vector<2x64xf32> -> vector<2x64xf32>
    %47 = arith.addf %42, %46 : vector<2x64xf32>
    %c2_32 = arith.constant 2 : index
    %c0_33 = arith.constant 0 : index
    %c0_34 = arith.constant 0 : index
    %48 = vector.load %arg7[%c2_32, %c0_33, %c0_34] : memref<3x2x2xf32, #tpu.memory_space<vmem>>, vector<1x2x2xf32>
    %49 = vector.shape_cast %48 : vector<1x2x2xf32> to vector<2x2xf32>
    %50 = vector.extract_strided_slice %38 {offsets = [0, 8], sizes = [2, 64], strides = [1, 1]} : vector<2x72xf32> to vector<2x64xf32>
    %cst_35 = arith.constant dense<0.000000e+00> : vector<2x64xf32>
    %51 = tpu.matmul %49, %50, %cst_35 {dimension_numbers = #tpu.dot_dimension_numbers<[1], [0], [0], [1], [0, 0, 1, 1], [], []>} : vector<2x2xf32>, vector<2x64xf32>, vector<2x64xf32> -> vector<2x64xf32>
    %52 = arith.addf %47, %51 : vector<2x64xf32>
    %c0_36 = arith.constant 0 : index
    %c0_37 = arith.constant 0 : index
    %53 = vector.load %arg8[%c0_36, %c0_37] : memref<2x1xf32, #tpu.memory_space<vmem>>, vector<2x1xf32>
    %54 = vector.broadcast %53 : vector<2x1xf32> to vector<2x64xf32>
    %55 = arith.addf %52, %54 : vector<2x64xf32>
    %cst_38 = arith.constant 0.000000e+00 : f32
    %56 = vector.broadcast %cst_38 : f32 to vector<2x64xf32>
    %57 = arith.cmpf ogt, %55, %56 : vector<2x64xf32>
    %cst_39 = arith.constant 2.000000e-01 : f32
    %58 = vector.broadcast %cst_39 : f32 to vector<2x64xf32>
    %59 = arith.mulf %58, %55 : vector<2x64xf32>
    %60 = arith.select %57, %55, %59 : vector<2x64xi1>, vector<2x64xf32>
    %61 = arith.addf %18, %60 : vector<2x64xf32>
    %cst_40 = arith.constant 0xFF800000 : f32
    %62 = vector.broadcast %cst_40 : f32 to vector<2x4xf32>
    %63 = tpu.concatenate %62, %61, %62 in 1 : vector<2x4xf32>, vector<2x64xf32>, vector<2x4xf32> -> vector<2x72xf32>
    %64 = vector.extract_strided_slice %63 {offsets = [0, 0], sizes = [2, 64], strides = [1, 1]} : vector<2x72xf32> to vector<2x64xf32>
    %65 = vector.extract_strided_slice %63 {offsets = [0, 4], sizes = [2, 64], strides = [1, 1]} : vector<2x72xf32> to vector<2x64xf32>
    %66 = arith.maximumf %64, %65 : vector<2x64xf32>
    %67 = vector.extract_strided_slice %63 {offsets = [0, 8], sizes = [2, 64], strides = [1, 1]} : vector<2x72xf32> to vector<2x64xf32>
    %68 = arith.maximumf %66, %67 : vector<2x64xf32>
    %c0_41 = arith.constant 0 : index
    %c0_42 = arith.constant 0 : index
    %c0_43 = arith.constant 0 : index
    %69 = vector.load %arg9[%c0_41, %c0_42, %c0_43] : memref<1x2x64xf32, #tpu.memory_space<vmem>>, vector<1x2x64xf32>
    %70 = vector.shape_cast %69 : vector<1x2x64xf32> to vector<2x64xf32>
    %71 = vector.shape_cast %68 : vector<2x64xf32> to vector<1x2x64xf32>
    tpu.vector_store %arg9[%c0_41, %c0_42, %c0_43], %71 {strides = array<i32>} : memref<1x2x64xf32, #tpu.memory_space<vmem>>, vector<1x2x64xf32>,
    return
  }
  func.func @transform_0(%arg0: i32) -> (i32, i32, i32) {
    %c0_i32 = arith.constant 0 : i32
    %c0_i32_0 = arith.constant 0 : i32
    %c0_i32_1 = arith.constant 0 : i32
    return %arg0, %c0_i32, %c0_i32_0 : i32, i32, i32
  }
  func.func @transform_1(%arg0: i32) -> (i32, i32, i32) {
    %c0_i32 = arith.constant 0 : i32
    %c0_i32_0 = arith.constant 0 : i32
    %c0_i32_1 = arith.constant 0 : i32
    return %arg0, %c0_i32, %c0_i32_0 : i32, i32, i32
  }
  func.func @transform_2(%arg0: i32) -> (i32, i32) {
    %c0_i32 = arith.constant 0 : i32
    %c0_i32_0 = arith.constant 0 : i32
    %c0_i32_1 = arith.constant 0 : i32
    return %c0_i32, %c0_i32_0 : i32, i32
  }
  func.func @transform_3(%arg0: i32) -> (i32, i32) {
    %c0_i32 = arith.constant 0 : i32
    %c0_i32_0 = arith.constant 0 : i32
    %c0_i32_1 = arith.constant 0 : i32
    return %c0_i32, %c0_i32_0 : i32, i32
  }
  func.func @transform_4(%arg0: i32) -> (i32, i32, i32) {
    %c0_i32 = arith.constant 0 : i32
    %c0_i32_0 = arith.constant 0 : i32
    %c0_i32_1 = arith.constant 0 : i32
    %c0_i32_2 = arith.constant 0 : i32
    return %c0_i32, %c0_i32_0, %c0_i32_1 : i32, i32, i32
  }
  func.func @transform_5(%arg0: i32) -> (i32, i32) {
    %c0_i32 = arith.constant 0 : i32
    %c0_i32_0 = arith.constant 0 : i32
    %c0_i32_1 = arith.constant 0 : i32
    return %c0_i32, %c0_i32_0 : i32, i32
  }
  func.func @transform_6(%arg0: i32) -> (i32, i32, i32) {
    %c0_i32 = arith.constant 0 : i32
    %c0_i32_0 = arith.constant 0 : i32
    %c0_i32_1 = arith.constant 0 : i32
    %c0_i32_2 = arith.constant 0 : i32
    return %c0_i32, %c0_i32_0, %c0_i32_1 : i32, i32, i32
  }
  func.func @transform_7(%arg0: i32) -> (i32, i32) {
    %c0_i32 = arith.constant 0 : i32
    %c0_i32_0 = arith.constant 0 : i32
    %c0_i32_1 = arith.constant 0 : i32
    return %c0_i32, %c0_i32_0 : i32, i32
  }
  func.func @transform_8(%arg0: i32) -> (i32, i32, i32) {
    %c0_i32 = arith.constant 0 : i32
    %c0_i32_0 = arith.constant 0 : i32
    %c0_i32_1 = arith.constant 0 : i32
    return %arg0, %c0_i32, %c0_i32_0 : i32, i32, i32
  }
}

</mosaic_0001>

<llo_original>
// kernel: tpu_custom_call.1
$region0: #{tpu_custom_call.1}
  #allocation0 [shape = 'u32[]', space=smem, size = 0x4, offset = 0x4, fixed_abs, tag = 'smem constant byte address 0x4 - core index']
  #allocation1 [shape = 'u32[144,128]{1,0:T(1,128)}', space=vmem, size = 0x12000, scoped, tag = 'internal scratch']
  %s0 = inlined_call_operand.hbm [shape: f32[1,64,68], index: 0, kind: input, shape index: {}]
  %s1 = inlined_call_operand.hbm [shape: f32[1,64,68], index: 1, kind: input, shape index: {}]
  %s2 = inlined_call_operand.vmem [shape: f32[2,256], index: 2, kind: input, shape index: {}]
  %s3 = inlined_call_operand.vmem [shape: f32[2,1], index: 3, kind: input, shape index: {}]
  %s4 = inlined_call_operand.vmem [shape: f32[3,2,2], index: 4, kind: input, shape index: {}]
  %s5 = inlined_call_operand.vmem [shape: f32[2,1], index: 5, kind: input, shape index: {}]
  %s6 = inlined_call_operand.vmem [shape: f32[3,2,2], index: 6, kind: input, shape index: {}]
  %s7 = inlined_call_operand.vmem [shape: f32[2,1], index: 7, kind: input, shape index: {}]
  %s8 = inlined_call_operand.hbm [shape: f32[1,2,64], index: 8, kind: output, shape index: {}]
  %s9 = sld [smem:[#allocation0]]
  $region50: #{tpu_custom_call.1} parent=0
    _
  %s11 = ssub.s32 1, %s9
  %s12 = scalar_select 0, %s11, %s9
  $region1: #{tpu_custom_call.1} parent=0
    #allocation2 [shape = 'u8[32768]{0}', space=vmem, size = 0x8000, scoped, tag = 'input window, operand 0, single buffered']
    #allocation3 [shape = 's32[1]{0}', space=sflag, size = 0x4, scoped, tag = 'scoped memory for tpu_custom_call.1']
    #allocation4 [shape = 's32[1]{0}', space=sflag, size = 0x4, scoped, tag = 'scoped memory for tpu_custom_call.1']
    #allocation5 [shape = 'u8[32768]{0}', space=vmem, size = 0x8000, scoped, tag = 'input window, operand 1, single buffered']
    #allocation6 [shape = 's32[1]{0}', space=sflag, size = 0x4, scoped, tag = 'scoped memory for tpu_custom_call.1']
    #allocation7 [shape = 'u8[1024]{0}', space=vmem, size = 0x400, scoped, tag = 'output window, operand 0, single buffered']
    %13 = vsyncpa [#allocation3], 0
    %14 = vsyncpa [#allocation6], 0
    %15 = vsyncpa [#allocation4], 0
    // Predicated region
    $region2: #{tpu_custom_call.1} parent=1 // pred_check
      _
    $region3: #{tpu_custom_call.1} parent=1 // pred_check_branch
      %17 = sbr.rel (0) target = $region5
    $region4: #{tpu_custom_call.1} parent=1 // pred_region
      %s19 = ssub.s32 1024, 1024
      %20 = vsyncadd [#allocation3], %s19
      %s21 = sshll.u32 [#allocation2], 4
      %s22 = int_to_ptr.vmem [resolvable:$true] %s21
      %27 = dma.hbm_to_vmem [thread:$0]  %s0, 1024, %s22, [#allocation3], 128, 128, 8
    $region5: #{tpu_custom_call.1} parent=1 // pred_fallthru
      _
    // Predicated region
    $region6: #{tpu_custom_call.1} parent=1 // pred_check
      _
    $region7: #{tpu_custom_call.1} parent=1 // pred_check_branch
      %29 = sbr.rel (0) target = $region9
    $region8: #{tpu_custom_call.1} parent=1 // pred_region
      %s31 = ssub.s32 1024, 1024
      %32 = vsyncadd [#allocation6], %s31
      %s33 = sshll.u32 [#allocation5], 4
      %s34 = int_to_ptr.vmem [resolvable:$true] %s33
      %39 = dma.hbm_to_vmem [thread:$0]  %s1, 1024, %s34, [#allocation6], 128, 128, 8
    $region9: #{tpu_custom_call.1} parent=1 // pred_fallthru
      _
    // Predicated region
    $region10: #{tpu_custom_call.1} parent=1 // pred_check
      _
    $region11: #{tpu_custom_call.1} parent=1 // pred_check_branch
      %41 = sbr.rel (0) target = $region13
    $region12: #{tpu_custom_call.1} parent=1 // pred_region
      _
    $region13: #{tpu_custom_call.1} parent=1 // pred_fallthru
      _
    // Predicated region
    $region14: #{tpu_custom_call.1} parent=1 // pred_check
      _
    $region15: #{tpu_custom_call.1} parent=1 // pred_check_branch
      %43 = sbr.rel (0) target = $region17
    $region16: #{tpu_custom_call.1} parent=1 // pred_region
      _
    $region17: #{tpu_custom_call.1} parent=1 // pred_fallthru
      _
    // Predicated region
    $region18: #{tpu_custom_call.1} parent=1 // pred_check
      _
    $region19: #{tpu_custom_call.1} parent=1 // pred_check_branch
      %45 = sbr.rel (0) target = $region21
    $region20: #{tpu_custom_call.1} parent=1 // pred_region
      _
    $region21: #{tpu_custom_call.1} parent=1 // pred_fallthru
      _
    // Predicated region
    $region22: #{tpu_custom_call.1} parent=1 // pred_check
      _
    $region23: #{tpu_custom_call.1} parent=1 // pred_check_branch
      %47 = sbr.rel (0) target = $region25
    $region24: #{tpu_custom_call.1} parent=1 // pred_region
      _
    $region25: #{tpu_custom_call.1} parent=1 // pred_fallthru
      _
    // Predicated region
    $region26: #{tpu_custom_call.1} parent=1 // pred_check
      _
    $region27: #{tpu_custom_call.1} parent=1 // pred_check_branch
      %49 = sbr.rel (0) target = $region29
    $region28: #{tpu_custom_call.1} parent=1 // pred_region
      _
    $region29: #{tpu_custom_call.1} parent=1 // pred_fallthru
      _
    // Predicated region
    $region30: #{tpu_custom_call.1} parent=1 // pred_check
      _
    $region31: #{tpu_custom_call.1} parent=1 // pred_check_branch
      %51 = sbr.rel (0) target = $region33
    $region32: #{tpu_custom_call.1} parent=1 // pred_region
      _
    $region33: #{tpu_custom_call.1} parent=1 // pred_fallthru
      _
    // Predicated region
    $region34: #{tpu_custom_call.1} parent=1 // pred_check
      _
    $region35: #{tpu_custom_call.1} parent=1 // pred_check_branch
      %53 = sbr.rel (0) target = $region37
    $region36: #{tpu_custom_call.1} parent=1 // pred_region
      %54 = dma.done [#allocation3], 1024
    $region37: #{tpu_custom_call.1} parent=1 // pred_fallthru
      _
    // Predicated region
    $region38: #{tpu_custom_call.1} parent=1 // pred_check
      _
    $region39: #{tpu_custom_call.1} parent=1 // pred_check_branch
      %56 = sbr.rel (0) target = $region41
    $region40: #{tpu_custom_call.1} parent=1 // pred_region
      %57 = dma.done [#allocation6], 1024
    $region41: #{tpu_custom_call.1} parent=1 // pred_fallthru
      _
    %v58 = vld [vmem:[#allocation2] sm:$0xff]
    %v59 = vld [vmem:[#allocation2 + $0x8] sm:$0xff]
    %v60 = vld [vmem:[#allocation2 + $0x10] sm:$0xff]
    %v61 = vld [vmem:[#allocation2 + $0x18] sm:$0xff]
    %v62 = vld [vmem:[#allocation2 + $0x20] sm:$0xff]
    %v63 = vld [vmem:[#allocation2 + $0x28] sm:$0xff]
    %v64 = vld [vmem:[#allocation2 + $0x30] sm:$0xff]
    %v65 = vld [vmem:[#allocation2 + $0x38] sm:$0xff]
    %v66 = vld [vmem:[#allocation5] sm:$0xff]
    %v67 = vld [vmem:[#allocation5 + $0x8] sm:$0xff]
    %v68 = vld [vmem:[#allocation5 + $0x10] sm:$0xff]
    %v69 = vld [vmem:[#allocation5 + $0x18] sm:$0xff]
    %v70 = vld [vmem:[#allocation5 + $0x20] sm:$0xff]
    %v71 = vld [vmem:[#allocation5 + $0x28] sm:$0xff]
    %v72 = vld [vmem:[#allocation5 + $0x30] sm:$0xff]
    %v73 = vld [vmem:[#allocation5 + $0x38] sm:$0xff]
    %82 = vrot.lane.b32.xlu0 %v58, 124
    %v83 = vpop.permute.xlu0 %82
    %84 = vrot.lane.b32.xlu0 %v59, 124
    %v85 = vpop.permute.xlu0 %84
    %86 = vrot.lane.b32.xlu0 %v60, 124
    %v87 = vpop.permute.xlu0 %86
    %88 = vrot.lane.b32.xlu0 %v61, 124
    %v89 = vpop.permute.xlu0 %88
    %90 = vrot.lane.b32.xlu0 %v62, 124
    %v91 = vpop.permute.xlu0 %90
    %92 = vrot.lane.b32.xlu0 %v63, 124
    %v93 = vpop.permute.xlu0 %92
    %94 = vrot.lane.b32.xlu0 %v64, 124
    %v95 = vpop.permute.xlu0 %94
    %96 = vrot.lane.b32.xlu0 %v65, 124
    %v97 = vpop.permute.xlu0 %96
    %114 = vrot.lane.b32.xlu0 %v66, 124
    %v115 = vpop.permute.xlu0 %114
    %116 = vrot.lane.b32.xlu0 %v67, 124
    %v117 = vpop.permute.xlu0 %116
    %118 = vrot.lane.b32.xlu0 %v68, 124
    %v119 = vpop.permute.xlu0 %118
    %120 = vrot.lane.b32.xlu0 %v69, 124
    %v121 = vpop.permute.xlu0 %120
    %122 = vrot.lane.b32.xlu0 %v70, 124
    %v123 = vpop.permute.xlu0 %122
    %124 = vrot.lane.b32.xlu0 %v71, 124
    %v125 = vpop.permute.xlu0 %124
    %126 = vrot.lane.b32.xlu0 %v72, 124
    %v127 = vpop.permute.xlu0 %126
    %128 = vrot.lane.b32.xlu0 %v73, 124
    %v129 = vpop.permute.xlu0 %128
    %v138 = vld [vmem:[%s2] sm:$0xf]
    %v139 = vld [vmem:[%s3] sm:$0x3]
    %141 = vset.pattern.permute.xlu0 0
    %142 = vperm.xlu0 %141, %v139
    %v143 = vpop.permute.xlu0 %142
    %v147 = vunpack.c.l.s4 1983009808
    %v148 = vunpack.c.0.s8 %v147
    %v149 = vlaneseq
    %v150 = vshrl.u32 %v149, 7
    %v151 = vsub.s32 %v148, %v150
    %v152 = vrot.slane %v138, %v151
    %v153 = vcombine.high %v152, %v152
    %156 = vmatprep.subr.mxu0 0.0
    %157 = vmatpush1.msra.mxu0 %v73
    %158 = vmatprep.subr.mxu0 0.0
    %159 = vmatpush1.msra.mxu0 %v72
    %160 = vmatprep.subr.mxu0 0.0
    %161 = vmatpush1.msra.mxu0 %v71
    %162 = vmatprep.subr.mxu0 0.0
    %163 = vmatpush1.msra.mxu0 %v70
    %164 = vmatprep.subr.mxu0 0.0
    %165 = vmatpush1.msra.mxu0 %v69
    %166 = vmatprep.subr.mxu0 0.0
    %167 = vmatpush1.msra.mxu0 %v68
    %168 = vmatprep.subr.mxu0 0.0
    %169 = vmatpush1.msra.mxu0 %v67
    %170 = vmatprep.subr.mxu0 0.0
    %171 = vmatpush1.msra.mxu0 %v66
    %172 = vmatprep.subr.mxu0 0.0
    %173 = vmatpush1.msra.mxu0 %v65
    %174 = vmatprep.subr.mxu0 0.0
    %175 = vmatpush1.msra.mxu0 %v64
    %176 = vmatprep.subr.mxu0 0.0
    %177 = vmatpush1.msra.mxu0 %v63
    %178 = vmatprep.subr.mxu0 0.0
    %179 = vmatpush1.msra.mxu0 %v62
    %180 = vmatprep.subr.mxu0 0.0
    %181 = vmatpush1.msra.mxu0 %v61
    %182 = vmatprep.subr.mxu0 0.0
    %183 = vmatpush1.msra.mxu0 %v60
    %184 = vmatprep.subr.mxu0 0.0
    %185 = vmatpush1.msra.mxu0 %v59
    %186 = vmatprep.subr.mxu0 0.0
    %187 = vmatpush1.msra.mxu0 %v58
    %188 = vmatprep.subr.mxu0 0.0
    %189 = vmatpush2.msra.mxu0 %v129
    %190 = vmatprep.subr.mxu0 0.0
    %191 = vmatpush2.msra.mxu0 %v127
    %192 = vmatprep.subr.mxu0 0.0
    %193 = vmatpush2.msra.mxu0 %v125
    %194 = vmatprep.subr.mxu0 0.0
    %195 = vmatpush2.msra.mxu0 %v123
    %196 = vmatprep.subr.mxu0 0.0
    %197 = vmatpush2.msra.mxu0 %v121
    %198 = vmatprep.subr.mxu0 0.0
    %199 = vmatpush2.msra.mxu0 %v119
    %200 = vmatprep.subr.mxu0 0.0
    %201 = vmatpush2.msra.mxu0 %v117
    %202 = vmatprep.subr.mxu0 0.0
    %203 = vmatpush2.msra.mxu0 %v115
    %204 = vmatprep.subr.mxu0 0.0
    %205 = vmatpush2.msra.mxu0 %v97
    %206 = vmatprep.subr.mxu0 0.0
    %207 = vmatpush2.msra.mxu0 %v95
    %208 = vmatprep.subr.mxu0 0.0
    %209 = vmatpush2.msra.mxu0 %v93
    %210 = vmatprep.subr.mxu0 0.0
    %211 = vmatpush2.msra.mxu0 %v91
    %212 = vmatprep.subr.mxu0 0.0
    %213 = vmatpush2.msra.mxu0 %v89
    %214 = vmatprep.subr.mxu0 0.0
    %215 = vmatpush2.msra.mxu0 %v87
    %216 = vmatprep.subr.mxu0 0.0
    %217 = vmatpush2.msra.mxu0 %v85
    %218 = vmatprep.subr.mxu0 0.0
    %219 = vmatpush2.msra.mxu0 %v83
    %220 = vmatprep.mubr.f32.mxu0 %v153
    %221 = vmatmul.mubr.f32.gmra.mxu0 %v152
    %v222 = vpop.f32.mrf.mxu0
    %v223 = vadd.f32 %v143, %v222
    %v224 = vpop.f32.mrf.mxu0
    %225 = vdwg.mxu0
    %vm226 = vcmp.gt.f32.partialorder %v223, 0.0
    %v227 = vmul.f32 %v223, 0.2
    %v228 = vsel %vm226, %v223, %v227
    %230 = vrot.lane.b32.xlu0 %v228, 4
    %v231 = vpop.permute.xlu0 %230
    %vm233 = vcmask 31744
    %v234 = vsel %vm233, 0.0, %v231
    %vm235 = vcmask 556032
    %v236 = vsel %vm235, %v234, 0.0
    %v237 = vld [vmem:[%s4] sm:$0x3]
    %s238 = scalar_lea.vmem %s4, 2
    %v239 = vld [vmem:[%s238] sm:$0x3]
    %241 = vrot.lane.b32.xlu0 %v236, 124
    %v242 = vpop.permute.xlu0 %241
    %vm243 = vcmask 15360
    %v245 = vsel %vm243, %v239, 0
    %vm247 = vcmask 1041408
    %v248 = vsel %vm247, %v242, 0
    %250 = vmatprep.subr.mxu0 0.0
    %251 = vmatpush1.msra.mxu0 0.0
    %252 = vmatprep.subr.mxu0 0.0
    %253 = vmatpush1.msra.mxu0 0.0
    %254 = vmatprep.subr.mxu0 0.0
    %255 = vmatpush1.msra.mxu0 0.0
    %256 = vmatprep.subr.mxu0 0.0
    %257 = vmatpush1.msra.mxu0 0.0
    %258 = vmatprep.subr.mxu0 0.0
    %259 = vmatpush1.msra.mxu0 0.0
    %260 = vmatprep.subr.mxu0 0.0
    %261 = vmatpush1.msra.mxu0 0.0
    %262 = vmatprep.subr.mxu0 0.0
    %263 = vmatpush1.msra.mxu0 0.0
    %264 = vmatprep.subr.mxu0 0.0
    %265 = vmatpush1.msra.mxu0 0.0
    %266 = vmatprep.subr.mxu0 0.0
    %267 = vmatpush1.msra.mxu0 0.0
    %268 = vmatprep.subr.mxu0 0.0
    %269 = vmatpush1.msra.mxu0 0.0
    %270 = vmatprep.subr.mxu0 0.0
    %271 = vmatpush1.msra.mxu0 0.0
    %272 = vmatprep.subr.mxu0 0.0
    %273 = vmatpush1.msra.mxu0 0.0
    %274 = vmatprep.subr.mxu0 0.0
    %275 = vmatpush1.msra.mxu0 0.0
    %276 = vmatprep.subr.mxu0 0.0
    %277 = vmatpush1.msra.mxu0 0.0
    %278 = vmatprep.subr.mxu0 0.0
    %279 = vmatpush1.msra.mxu0 0.0
    %280 = vmatprep.subr.mxu0 0.0
    %281 = vmatpush1.msra.mxu0 %v248
    %282 = vmatprep.subr.mxu0 0.0
    %283 = vmatpush2.msra.mxu0 0.0
    %284 = vmatprep.subr.mxu0 0.0
    %285 = vmatpush2.msra.mxu0 0.0
    %286 = vmatprep.subr.mxu0 0.0
    %287 = vmatpush2.msra.mxu0 0.0
    %288 = vmatprep.subr.mxu0 0.0
    %289 = vmatpush2.msra.mxu0 0.0
    %290 = vmatprep.subr.mxu0 0.0
    %291 = vmatpush2.msra.mxu0 0.0
    %292 = vmatprep.subr.mxu0 0.0
    %293 = vmatpush2.msra.mxu0 0.0
    %294 = vmatprep.subr.mxu0 0.0
    %295 = vmatpush2.msra.mxu0 0.0
    %296 = vmatprep.subr.mxu0 0.0
    %297 = vmatpush2.msra.mxu0 0.0
    %298 = vmatprep.subr.mxu0 0.0
    %299 = vmatpush2.msra.mxu0 0.0
    %300 = vmatprep.subr.mxu0 0.0
    %301 = vmatpush2.msra.mxu0 0.0
    %302 = vmatprep.subr.mxu0 0.0
    %303 = vmatpush2.msra.mxu0 0.0
    %304 = vmatprep.subr.mxu0 0.0
    %305 = vmatpush2.msra.mxu0 0.0
    %306 = vmatprep.subr.mxu0 0.0
    %307 = vmatpush2.msra.mxu0 0.0
    %308 = vmatprep.subr.mxu0 0.0
    %309 = vmatpush2.msra.mxu0 0.0
    %310 = vmatprep.subr.mxu0 0.0
    %311 = vmatpush2.msra.mxu0 0.0
    %312 = vmatprep.subr.mxu0 0.0
    %313 = vmatpush2.msra.mxu0 0.0
    %314 = vmatprep.mubr.f32.mxu0 0.0
    %315 = vmatmul.mubr.f32.gmra.mxu0 %v245
    %v316 = vpop.f32.mrf.mxu0
    %v317 = vadd.f32 0.0, %v316
    %v318 = vpop.f32.mrf.mxu0
    %319 = vdwg.mxu0
    %v321 = vsel %vm243, %v237, 0
    %v323 = vsel %vm247, %v236, 0
    %325 = vmatprep.subr.mxu0 0.0
    %326 = vmatpush1.msra.mxu0 0.0
    %327 = vmatprep.subr.mxu0 0.0
    %328 = vmatpush1.msra.mxu0 0.0
    %329 = vmatprep.subr.mxu0 0.0
    %330 = vmatpush1.msra.mxu0 0.0
    %331 = vmatprep.subr.mxu0 0.0
    %332 = vmatpush1.msra.mxu0 0.0
    %333 = vmatprep.subr.mxu0 0.0
    %334 = vmatpush1.msra.mxu0 0.0
    %335 = vmatprep.subr.mxu0 0.0
    %336 = vmatpush1.msra.mxu0 0.0
    %337 = vmatprep.subr.mxu0 0.0
    %338 = vmatpush1.msra.mxu0 0.0
    %339 = vmatprep.subr.mxu0 0.0
    %340 = vmatpush1.msra.mxu0 0.0
    %341 = vmatprep.subr.mxu0 0.0
    %342 = vmatpush1.msra.mxu0 0.0
    %343 = vmatprep.subr.mxu0 0.0
    %344 = vmatpush1.msra.mxu0 0.0
    %345 = vmatprep.subr.mxu0 0.0
    %346 = vmatpush1.msra.mxu0 0.0
    %347 = vmatprep.subr.mxu0 0.0
    %348 = vmatpush1.msra.mxu0 0.0
    %349 = vmatprep.subr.mxu0 0.0
    %350 = vmatpush1.msra.mxu0 0.0
    %351 = vmatprep.subr.mxu0 0.0
    %352 = vmatpush1.msra.mxu0 0.0
    %353 = vmatprep.subr.mxu0 0.0
    %354 = vmatpush1.msra.mxu0 0.0
    %355 = vmatprep.subr.mxu0 0.0
    %356 = vmatpush1.msra.mxu0 %v323
    %357 = vmatprep.subr.mxu0 0.0
    %358 = vmatpush2.msra.mxu0 0.0
    %359 = vmatprep.subr.mxu0 0.0
    %360 = vmatpush2.msra.mxu0 0.0
    %361 = vmatprep.subr.mxu0 0.0
    %362 = vmatpush2.msra.mxu0 0.0
    %363 = vmatprep.subr.mxu0 0.0
    %364 = vmatpush2.msra.mxu0 0.0
    %365 = vmatprep.subr.mxu0 0.0
    %366 = vmatpush2.msra.mxu0 0.0
    %367 = vmatprep.subr.mxu0 0.0
    %368 = vmatpush2.msra.mxu0 0.0
    %369 = vmatprep.subr.mxu0 0.0
    %370 = vmatpush2.msra.mxu0 0.0
    %371 = vmatprep.subr.mxu0 0.0
    %372 = vmatpush2.msra.mxu0 0.0
    %373 = vmatprep.subr.mxu0 0.0
    %374 = vmatpush2.msra.mxu0 0.0
    %375 = vmatprep.subr.mxu0 0.0
    %376 = vmatpush2.msra.mxu0 0.0
    %377 = vmatprep.subr.mxu0 0.0
    %378 = vmatpush2.msra.mxu0 0.0
    %379 = vmatprep.subr.mxu0 0.0
    %380 = vmatpush2.msra.mxu0 0.0
    %381 = vmatprep.subr.mxu0 0.0
    %382 = vmatpush2.msra.mxu0 0.0
    %383 = vmatprep.subr.mxu0 0.0
    %384 = vmatpush2.msra.mxu0 0.0
    %385 = vmatprep.subr.mxu0 0.0
    %386 = vmatpush2.msra.mxu0 0.0
    %387 = vmatprep.subr.mxu0 0.0
    %388 = vmatpush2.msra.mxu0 0.0
    %389 = vmatprep.mubr.f32.mxu0 0.0
    %390 = vmatmul.mubr.f32.gmra.mxu0 %v321
    %v391 = vpop.f32.mrf.mxu0
    %v392 = vadd.f32 %v317, %v391
    %v393 = vpop.f32.mrf.mxu0
    %394 = vdwg.mxu0
    %s395 = scalar_lea.vmem %s4, 4
    %v396 = vld [vmem:[%s395] sm:$0x3]
    %397 = vrot.lane.b32.xlu0 %v236, 120
    %v398 = vpop.permute.xlu0 %397
    %v400 = vsel %vm243, %v396, 0
    %v402 = vsel %vm247, %v398, 0
    %404 = vmatprep.subr.mxu0 0.0
    %405 = vmatpush1.msra.mxu0 0.0
    %406 = vmatprep.subr.mxu0 0.0
    %407 = vmatpush1.msra.mxu0 0.0
    %408 = vmatprep.subr.mxu0 0.0
    %409 = vmatpush1.msra.mxu0 0.0
    %410 = vmatprep.subr.mxu0 0.0
    %411 = vmatpush1.msra.mxu0 0.0
    %412 = vmatprep.subr.mxu0 0.0
    %413 = vmatpush1.msra.mxu0 0.0
    %414 = vmatprep.subr.mxu0 0.0
    %415 = vmatpush1.msra.mxu0 0.0
    %416 = vmatprep.subr.mxu0 0.0
    %417 = vmatpush1.msra.mxu0 0.0
    %418 = vmatprep.subr.mxu0 0.0
    %419 = vmatpush1.msra.mxu0 0.0
    %420 = vmatprep.subr.mxu0 0.0
    %421 = vmatpush1.msra.mxu0 0.0
    %422 = vmatprep.subr.mxu0 0.0
    %423 = vmatpush1.msra.mxu0 0.0
    %424 = vmatprep.subr.mxu0 0.0
    %425 = vmatpush1.msra.mxu0 0.0
    %426 = vmatprep.subr.mxu0 0.0
    %427 = vmatpush1.msra.mxu0 0.0
    %428 = vmatprep.subr.mxu0 0.0
    %429 = vmatpush1.msra.mxu0 0.0
    %430 = vmatprep.subr.mxu0 0.0
    %431 = vmatpush1.msra.mxu0 0.0
    %432 = vmatprep.subr.mxu0 0.0
    %433 = vmatpush1.msra.mxu0 0.0
    %434 = vmatprep.subr.mxu0 0.0
    %435 = vmatpush1.msra.mxu0 %v402
    %436 = vmatprep.subr.mxu0 0.0
    %437 = vmatpush2.msra.mxu0 0.0
    %438 = vmatprep.subr.mxu0 0.0
    %439 = vmatpush2.msra.mxu0 0.0
    %440 = vmatprep.subr.mxu0 0.0
    %441 = vmatpush2.msra.mxu0 0.0
    %442 = vmatprep.subr.mxu0 0.0
    %443 = vmatpush2.msra.mxu0 0.0
    %444 = vmatprep.subr.mxu0 0.0
    %445 = vmatpush2.msra.mxu0 0.0
    %446 = vmatprep.subr.mxu0 0.0
    %447 = vmatpush2.msra.mxu0 0.0
    %448 = vmatprep.subr.mxu0 0.0
    %449 = vmatpush2.msra.mxu0 0.0
    %450 = vmatprep.subr.mxu0 0.0
    %451 = vmatpush2.msra.mxu0 0.0
    %452 = vmatprep.subr.mxu0 0.0
    %453 = vmatpush2.msra.mxu0 0.0
    %454 = vmatprep.subr.mxu0 0.0
    %455 = vmatpush2.msra.mxu0 0.0
    %456 = vmatprep.subr.mxu0 0.0
    %457 = vmatpush2.msra.mxu0 0.0
    %458 = vmatprep.subr.mxu0 0.0
    %459 = vmatpush2.msra.mxu0 0.0
    %460 = vmatprep.subr.mxu0 0.0
    %461 = vmatpush2.msra.mxu0 0.0
    %462 = vmatprep.subr.mxu0 0.0
    %463 = vmatpush2.msra.mxu0 0.0
    %464 = vmatprep.subr.mxu0 0.0
    %465 = vmatpush2.msra.mxu0 0.0
    %466 = vmatprep.subr.mxu0 0.0
    %467 = vmatpush2.msra.mxu0 0.0
    %468 = vmatprep.mubr.f32.mxu0 0.0
    %469 = vmatmul.mubr.f32.gmra.mxu0 %v400
    %v470 = vpop.f32.mrf.mxu0
    %v471 = vadd.f32 0.0, %v470
    %v472 = vpop.f32.mrf.mxu0
    %473 = vdwg.mxu0
    %v474 = vadd.f32 %v392, %v471
    %v475 = vld [vmem:[%s5] sm:$0x3]
    %477 = vset.pattern.permute.xlu0 0
    %478 = vperm.xlu0 %477, %v475
    %v479 = vpop.permute.xlu0 %478
    %v481 = vadd.f32 %v474, %v479
    %483 = vrot.lane.b32.xlu0 %v481, 4
    %v484 = vpop.permute.xlu0 %483
    %v486 = vsel %vm233, 0.0, %v484
    %v487 = vsel %vm235, %v486, 0.0
    %v488 = vld [vmem:[%s6] sm:$0x3]
    %s489 = scalar_lea.vmem %s6, 2
    %v490 = vld [vmem:[%s489] sm:$0x3]
    %492 = vrot.lane.b32.xlu0 %v487, 124
    %v493 = vpop.permute.xlu0 %492
    %v495 = vsel %vm243, %v490, 0
    %v497 = vsel %vm247, %v493, 0
    %499 = vmatprep.subr.mxu0 0.0
    %500 = vmatpush1.msra.mxu0 0.0
    %501 = vmatprep.subr.mxu0 0.0
    %502 = vmatpush1.msra.mxu0 0.0
    %503 = vmatprep.subr.mxu0 0.0
    %504 = vmatpush1.msra.mxu0 0.0
    %505 = vmatprep.subr.mxu0 0.0
    %506 = vmatpush1.msra.mxu0 0.0
    %507 = vmatprep.subr.mxu0 0.0
    %508 = vmatpush1.msra.mxu0 0.0
    %509 = vmatprep.subr.mxu0 0.0
    %510 = vmatpush1.msra.mxu0 0.0
    %511 = vmatprep.subr.mxu0 0.0
    %512 = vmatpush1.msra.mxu0 0.0
    %513 = vmatprep.subr.mxu0 0.0
    %514 = vmatpush1.msra.mxu0 0.0
    %515 = vmatprep.subr.mxu0 0.0
    %516 = vmatpush1.msra.mxu0 0.0
    %517 = vmatprep.subr.mxu0 0.0
    %518 = vmatpush1.msra.mxu0 0.0
    %519 = vmatprep.subr.mxu0 0.0
    %520 = vmatpush1.msra.mxu0 0.0
    %521 = vmatprep.subr.mxu0 0.0
    %522 = vmatpush1.msra.mxu0 0.0
    %523 = vmatprep.subr.mxu0 0.0
    %524 = vmatpush1.msra.mxu0 0.0
    %525 = vmatprep.subr.mxu0 0.0
    %526 = vmatpush1.msra.mxu0 0.0
    %527 = vmatprep.subr.mxu0 0.0
    %528 = vmatpush1.msra.mxu0 0.0
    %529 = vmatprep.subr.mxu0 0.0
    %530 = vmatpush1.msra.mxu0 %v497
    %531 = vmatprep.subr.mxu0 0.0
    %532 = vmatpush2.msra.mxu0 0.0
    %533 = vmatprep.subr.mxu0 0.0
    %534 = vmatpush2.msra.mxu0 0.0
    %535 = vmatprep.subr.mxu0 0.0
    %536 = vmatpush2.msra.mxu0 0.0
    %537 = vmatprep.subr.mxu0 0.0
    %538 = vmatpush2.msra.mxu0 0.0
    %539 = vmatprep.subr.mxu0 0.0
    %540 = vmatpush2.msra.mxu0 0.0
    %541 = vmatprep.subr.mxu0 0.0
    %542 = vmatpush2.msra.mxu0 0.0
    %543 = vmatprep.subr.mxu0 0.0
    %544 = vmatpush2.msra.mxu0 0.0
    %545 = vmatprep.subr.mxu0 0.0
    %546 = vmatpush2.msra.mxu0 0.0
    %547 = vmatprep.subr.mxu0 0.0
    %548 = vmatpush2.msra.mxu0 0.0
    %549 = vmatprep.subr.mxu0 0.0
    %550 = vmatpush2.msra.mxu0 0.0
    %551 = vmatprep.subr.mxu0 0.0
    %552 = vmatpush2.msra.mxu0 0.0
    %553 = vmatprep.subr.mxu0 0.0
    %554 = vmatpush2.msra.mxu0 0.0
    %555 = vmatprep.subr.mxu0 0.0
    %556 = vmatpush2.msra.mxu0 0.0
    %557 = vmatprep.subr.mxu0 0.0
    %558 = vmatpush2.msra.mxu0 0.0
    %559 = vmatprep.subr.mxu0 0.0
    %560 = vmatpush2.msra.mxu0 0.0
    %561 = vmatprep.subr.mxu0 0.0
    %562 = vmatpush2.msra.mxu0 0.0
    %563 = vmatprep.mubr.f32.mxu0 0.0
    %564 = vmatmul.mubr.f32.gmra.mxu0 %v495
    %v565 = vpop.f32.mrf.mxu0
    %v566 = vadd.f32 0.0, %v565
    %v567 = vpop.f32.mrf.mxu0
    %568 = vdwg.mxu0
    %v570 = vsel %vm243, %v488, 0
    %v572 = vsel %vm247, %v487, 0
    %574 = vmatprep.subr.mxu0 0.0
    %575 = vmatpush1.msra.mxu0 0.0
    %576 = vmatprep.subr.mxu0 0.0
    %577 = vmatpush1.msra.mxu0 0.0
    %578 = vmatprep.subr.mxu0 0.0
    %579 = vmatpush1.msra.mxu0 0.0
    %580 = vmatprep.subr.mxu0 0.0
    %581 = vmatpush1.msra.mxu0 0.0
    %582 = vmatprep.subr.mxu0 0.0
    %583 = vmatpush1.msra.mxu0 0.0
    %584 = vmatprep.subr.mxu0 0.0
    %585 = vmatpush1.msra.mxu0 0.0
    %586 = vmatprep.subr.mxu0 0.0
    %587 = vmatpush1.msra.mxu0 0.0
    %588 = vmatprep.subr.mxu0 0.0
    %589 = vmatpush1.msra.mxu0 0.0
    %590 = vmatprep.subr.mxu0 0.0
    %591 = vmatpush1.msra.mxu0 0.0
    %592 = vmatprep.subr.mxu0 0.0
    %593 = vmatpush1.msra.mxu0 0.0
    %594 = vmatprep.subr.mxu0 0.0
    %595 = vmatpush1.msra.mxu0 0.0
    %596 = vmatprep.subr.mxu0 0.0
    %597 = vmatpush1.msra.mxu0 0.0
    %598 = vmatprep.subr.mxu0 0.0
    %599 = vmatpush1.msra.mxu0 0.0
    %600 = vmatprep.subr.mxu0 0.0
    %601 = vmatpush1.msra.mxu0 0.0
    %602 = vmatprep.subr.mxu0 0.0
    %603 = vmatpush1.msra.mxu0 0.0
    %604 = vmatprep.subr.mxu0 0.0
    %605 = vmatpush1.msra.mxu0 %v572
    %606 = vmatprep.subr.mxu0 0.0
    %607 = vmatpush2.msra.mxu0 0.0
    %608 = vmatprep.subr.mxu0 0.0
    %609 = vmatpush2.msra.mxu0 0.0
    %610 = vmatprep.subr.mxu0 0.0
    %611 = vmatpush2.msra.mxu0 0.0
    %612 = vmatprep.subr.mxu0 0.0
    %613 = vmatpush2.msra.mxu0 0.0
    %614 = vmatprep.subr.mxu0 0.0
    %615 = vmatpush2.msra.mxu0 0.0
    %616 = vmatprep.subr.mxu0 0.0
    %617 = vmatpush2.msra.mxu0 0.0
    %618 = vmatprep.subr.mxu0 0.0
    %619 = vmatpush2.msra.mxu0 0.0
    %620 = vmatprep.subr.mxu0 0.0
    %621 = vmatpush2.msra.mxu0 0.0
    %622 = vmatprep.subr.mxu0 0.0
    %623 = vmatpush2.msra.mxu0 0.0
    %624 = vmatprep.subr.mxu0 0.0
    %625 = vmatpush2.msra.mxu0 0.0
    %626 = vmatprep.subr.mxu0 0.0
    %627 = vmatpush2.msra.mxu0 0.0
    %628 = vmatprep.subr.mxu0 0.0
    %629 = vmatpush2.msra.mxu0 0.0
    %630 = vmatprep.subr.mxu0 0.0
    %631 = vmatpush2.msra.mxu0 0.0
    %632 = vmatprep.subr.mxu0 0.0
    %633 = vmatpush2.msra.mxu0 0.0
    %634 = vmatprep.subr.mxu0 0.0
    %635 = vmatpush2.msra.mxu0 0.0
    %636 = vmatprep.subr.mxu0 0.0
    %637 = vmatpush2.msra.mxu0 0.0
    %638 = vmatprep.mubr.f32.mxu0 0.0
    %639 = vmatmul.mubr.f32.gmra.mxu0 %v570
    %v640 = vpop.f32.mrf.mxu0
    %v641 = vadd.f32 %v566, %v640
    %v642 = vpop.f32.mrf.mxu0
    %643 = vdwg.mxu0
    %s644 = scalar_lea.vmem %s6, 4
    %v645 = vld [vmem:[%s644] sm:$0x3]
    %646 = vrot.lane.b32.xlu0 %v487, 120
    %v647 = vpop.permute.xlu0 %646
    %v649 = vsel %vm243, %v645, 0
    %v651 = vsel %vm247, %v647, 0
    %653 = vmatprep.subr.mxu0 0.0
    %654 = vmatpush1.msra.mxu0 0.0
    %655 = vmatprep.subr.mxu0 0.0
    %656 = vmatpush1.msra.mxu0 0.0
    %657 = vmatprep.subr.mxu0 0.0
    %658 = vmatpush1.msra.mxu0 0.0
    %659 = vmatprep.subr.mxu0 0.0
    %660 = vmatpush1.msra.mxu0 0.0
    %661 = vmatprep.subr.mxu0 0.0
    %662 = vmatpush1.msra.mxu0 0.0
    %663 = vmatprep.subr.mxu0 0.0
    %664 = vmatpush1.msra.mxu0 0.0
    %665 = vmatprep.subr.mxu0 0.0
    %666 = vmatpush1.msra.mxu0 0.0
    %667 = vmatprep.subr.mxu0 0.0
    %668 = vmatpush1.msra.mxu0 0.0
    %669 = vmatprep.subr.mxu0 0.0
    %670 = vmatpush1.msra.mxu0 0.0
    %671 = vmatprep.subr.mxu0 0.0
    %672 = vmatpush1.msra.mxu0 0.0
    %673 = vmatprep.subr.mxu0 0.0
    %674 = vmatpush1.msra.mxu0 0.0
    %675 = vmatprep.subr.mxu0 0.0
    %676 = vmatpush1.msra.mxu0 0.0
    %677 = vmatprep.subr.mxu0 0.0
    %678 = vmatpush1.msra.mxu0 0.0
    %679 = vmatprep.subr.mxu0 0.0
    %680 = vmatpush1.msra.mxu0 0.0
    %681 = vmatprep.subr.mxu0 0.0
    %682 = vmatpush1.msra.mxu0 0.0
    %683 = vmatprep.subr.mxu0 0.0
    %684 = vmatpush1.msra.mxu0 %v651
    %685 = vmatprep.subr.mxu0 0.0
    %686 = vmatpush2.msra.mxu0 0.0
    %687 = vmatprep.subr.mxu0 0.0
    %688 = vmatpush2.msra.mxu0 0.0
    %689 = vmatprep.subr.mxu0 0.0
    %690 = vmatpush2.msra.mxu0 0.0
    %691 = vmatprep.subr.mxu0 0.0
    %692 = vmatpush2.msra.mxu0 0.0
    %693 = vmatprep.subr.mxu0 0.0
    %694 = vmatpush2.msra.mxu0 0.0
    %695 = vmatprep.subr.mxu0 0.0
    %696 = vmatpush2.msra.mxu0 0.0
    %697 = vmatprep.subr.mxu0 0.0
    %698 = vmatpush2.msra.mxu0 0.0
    %699 = vmatprep.subr.mxu0 0.0
    %700 = vmatpush2.msra.mxu0 0.0
    %701 = vmatprep.subr.mxu0 0.0
    %702 = vmatpush2.msra.mxu0 0.0
    %703 = vmatprep.subr.mxu0 0.0
    %704 = vmatpush2.msra.mxu0 0.0
    %705 = vmatprep.subr.mxu0 0.0
    %706 = vmatpush2.msra.mxu0 0.0
    %707 = vmatprep.subr.mxu0 0.0
    %708 = vmatpush2.msra.mxu0 0.0
    %709 = vmatprep.subr.mxu0 0.0
    %710 = vmatpush2.msra.mxu0 0.0
    %711 = vmatprep.subr.mxu0 0.0
    %712 = vmatpush2.msra.mxu0 0.0
    %713 = vmatprep.subr.mxu0 0.0
    %714 = vmatpush2.msra.mxu0 0.0
    %715 = vmatprep.subr.mxu0 0.0
    %716 = vmatpush2.msra.mxu0 0.0
    %717 = vmatprep.mubr.f32.mxu0 0.0
    %718 = vmatmul.mubr.f32.gmra.mxu0 %v649
    %v719 = vpop.f32.mrf.mxu0
    %v720 = vadd.f32 0.0, %v719
    %v721 = vpop.f32.mrf.mxu0
    %722 = vdwg.mxu0
    %v723 = vadd.f32 %v641, %v720
    %v724 = vld [vmem:[%s7] sm:$0x3]
    %726 = vset.pattern.permute.xlu0 0
    %727 = vperm.xlu0 %726, %v724
    %v728 = vpop.permute.xlu0 %727
    %v730 = vadd.f32 %v723, %v728
    %vm731 = vcmp.gt.f32.partialorder %v730, 0.0
    %v732 = vmul.f32 %v730, 0.2
    %v733 = vsel %vm731, %v730, %v732
    %v734 = vadd.f32 %v228, %v733
    %736 = vrot.lane.b32.xlu0 %v734, 4
    %v737 = vpop.permute.xlu0 %736
    %v739 = vsel %vm233, -inf, %v737
    %v740 = vsel %vm235, %v739, -inf
    %742 = vrot.lane.b32.xlu0 %v740, 124
    %v743 = vpop.permute.xlu0 %742
    %v745 = vmax.f32 %v740, %v743
    %746 = vrot.lane.b32.xlu0 %v740, 120
    %v747 = vpop.permute.xlu0 %746
    %v749 = vmax.f32 %v745, %v747
    %vm750 = vcmask 517120
    %751 = vst.msk [vmem:[#allocation7] sm:$0x3] %vm750, %v749
    // Predicated region
    $region42: #{tpu_custom_call.1} parent=1 // pred_check
      _
    $region43: #{tpu_custom_call.1} parent=1 // pred_check_branch
      %753 = sbr.rel (0) target = $region45
    $region44: #{tpu_custom_call.1} parent=1 // pred_region
      %s755 = ssub.s32 32, 32
      %756 = vsyncadd [#allocation4], %s755
      %s758 = sshll.u32 [#allocation7], 4
      %s759 = int_to_ptr.vmem [resolvable:$true] %s758
      %761 = dma.vmem_to_hbm [thread:$0]  %s759, 32, %s8, [#allocation4]
    $region45: #{tpu_custom_call.1} parent=1 // pred_fallthru
      _
    // Predicated region
    $region46: #{tpu_custom_call.1} parent=1 // pred_check
      _
    $region47: #{tpu_custom_call.1} parent=1 // pred_check_branch
      %763 = sbr.rel (0) target = $region49
    $region48: #{tpu_custom_call.1} parent=1 // pred_region
      %764 = dma.done [#allocation4], 32
    $region49: #{tpu_custom_call.1} parent=1 // pred_fallthru
      _
    %765 = vsyncpa [#allocation3], 1
    %766 = vsyncpa [#allocation6], 1
    %767 = vsyncpa [#allocation4], 1

</llo_original>
